<compile_context>
chip_gen: v5e
topology: v5e:2x2
jax: 0.10.0
libtpu: 0.0.40
codegen_flags: <defaults>
</compile_context>

<pallas_src>
import jax
import jax.numpy as jnp
from jax import lax
from jax.experimental import pallas as pl
from jax.experimental.pallas import tpu as pltpu

K_CONV = 4          # convo_1_kernel
K_POOL = 3          # pool_1_kernel
LRELU_SLOPE = 0.01  # nn.LeakyReLU() default
NEG_INF = -1e30     # ceil-mode pooling pad; valid only while bias/pool/act are f32


def _lrelu(x):
    return jnp.where(x >= 0, x, LRELU_SLOPE * x)


def _round_up(x, m):
    return -(-x // m) * m


def _conv_toeplitz(w, b, length_in, pool_k):
    """Unroll a stride-1 Conv1d into a dense matmul weight (layout prep only).

    w: (c_out, c_in, K), b: (c_out,).  Returns
      W_toe: (l_pad*c_out, length_in*c_in)  position-major rows/cols
             (row = p_out*c_out + co, col = p_in*c_in + ci),
      b_vec: (l_pad*c_out, 1)  bias, NEG_INF on rows added to round the conv
             length up to a multiple of pool_k (ceil_mode padding).
    """
    c_out, c_in, kk = w.shape
    l_valid = length_in - kk + 1
    l_pad = -(-l_valid // pool_k) * pool_k
    p = jnp.arange(l_pad)[:, None]
    l = jnp.arange(length_in)[None, :]
    # sel[k, p, l] = 1 iff l == p + k and p is a real conv output position
    sel = ((l - p)[None, :, :] == jnp.arange(kk)[:, None, None]) \
        & (p < l_valid)[None, :, :]
    toe = jnp.einsum("ock,kpl->polc", w.astype(jnp.float32),
                     sel.astype(jnp.float32))
    b_vec = jnp.where((jnp.arange(l_pad) < l_valid)[:, None],
                      jnp.broadcast_to(b.astype(jnp.float32)[None, :],
                                       (l_pad, c_out)),
                      jnp.float32(NEG_INF))
    return (toe.reshape(l_pad * c_out, length_in * c_in),
            b_vec.reshape(l_pad * c_out, 1))


def convo_model2rls_forward(src, dw_filter, ref, params, *, lane_tile=1024):
    """src: (B, L, Cin) float32 (PyTorch passes NLC and transposes internally).

    Returns (B, odim) float32.
    """
    B, L, c_in = src.shape
    w1, b1 = params["w1"], params["b1"]
    w2, b2 = params["w2"], params["b2"]
    wh, bh = params["wh"], params["bh"]
    wo, bo = params["wo"], params["bo"]
    c1 = w1.shape[0]
    hdim = wh.shape[0]
    odim = wo.shape[0]

    l1 = L - K_CONV + 1
    l2 = -(-l1 // K_POOL)
    l2c = l2 - K_CONV + 1
    l3 = -(-l2c // K_POOL)
    assert wh.shape[1] == c1 * l3, "hidden_1 flat_dim mismatch"
    # NOTE: c1 % 8 == 0 keeps the pool-group sublane slices tile-aligned (no
    # Mosaic relayouts); other c1 are correct but slower.

    # ---- layout / weight prep (plain JAX, data independent, tiny) ----
    w1t, b1v = _conv_toeplitz(w1, b1, L, K_POOL)    # (R1, L*c_in), (R1, 1)
    w2t, b2v = _conv_toeplitz(w2, b2, l2, K_POOL)   # (R2, l2*c1),  (R2, 1)
    R1, R2 = w1t.shape[0], w2t.shape[0]
    # hidden_1 weight: PyTorch flattens channel-major (co*l3 + p); our rows are
    # position-major (p*c1 + co) -> permute the columns accordingly.
    whp = wh.reshape(hdim, c1, l3).transpose(0, 2, 1).reshape(hdim, l3 * c1)

    # One bias operand for all four layers (fewer per-step DMA bookkeeping ops).
    bias_all = jnp.concatenate(
        [b1v, b2v,
         bh.reshape(hdim, 1).astype(jnp.float32),
         bo.reshape(odim, 1).astype(jnp.float32)], axis=0)       # (Rtot, 1)

    # bf16 MXU operands (f32 accumulation); biases / elementwise stay f32.
    w1t = w1t.astype(jnp.bfloat16)
    w2t = w2t.astype(jnp.bfloat16)
    whp = whp.astype(jnp.bfloat16)
    wob = wo.astype(jnp.bfloat16)

    # ---- B-adaptive lane tile ----
    lane_tile = max(128, _round_up(int(lane_tile), 128))
    if B <= 128:
        tb = 128                                   # small-batch latency path
    else:
        # >= 2 grid steps so v7x's two TensorCores both get work.
        tb = min(lane_tile, _round_up(-(-B // 2), 128))
    b_pad = _round_up(B, tb)
    pad = b_pad - B

    # Activations stay batch-major f32 in HBM: reshape is metadata-only and the
    # pad (when any) touches fewer than tb rows.  No transpose, no cast pass.
    x_mat = src.reshape(B, L * c_in).astype(jnp.float32)          # (B, L*Cin)
    if pad:
        x_mat = jnp.pad(x_mat, ((0, pad), (0, 0)))
    # dw_filter / ref are tiny (B x odim); one fused lane-major operand.
    dwrf = jnp.concatenate([dw_filter, ref], axis=1).astype(jnp.float32).T
    if pad:
        dwrf = jnp.pad(dwrf, ((0, 0), (0, pad)))                  # (2*odim, b_pad)

    def kernel(x_ref, w1_ref, w2_ref, wh_ref, wo_ref, b_ref, dwrf_ref, out_ref):
        nb = out_ref.shape[-1]
        bias = b_ref[...]
        b1_ = bias[0:R1]
        b2_ = bias[R1:R1 + R2]
        bh_ = bias[R1 + R2:R1 + R2 + hdim]
        bo_ = bias[R1 + R2 + hdim:R1 + R2 + hdim + odim]

        def pool_max(a, n_out):
            # rows are position-major with the conv length already padded to a
            # multiple of K_POOL (pad rows carry NEG_INF bias): a tile-aligned
            # reshape + K_POOL-1 elementwise maxima == MaxPool1d(ceil_mode).
            ag = a.reshape(n_out, K_POOL * c1, nb)
            m = ag[:, :c1, :]
            for j in range(1, K_POOL):
                m = jnp.maximum(m, ag[:, j * c1:(j + 1) * c1, :])
            return m                                   # (n_out, c1, nb)

        # convo_1: NT matmul against the Toeplitz weight — x keeps its HBM
        # batch-major layout (tb, L*Cin); contracting the last dim of both
        # operands puts batch on lanes for everything downstream.
        xb = x_ref[...].astype(jnp.bfloat16)
        y = lax.dot_general(w1_ref[...], xb,
                            dimension_numbers=(((1,), (1,)), ((), ())),
                            preferred_element_type=jnp.float32) + b1_
        # pooling_1 (ceil) -> tanh
        y = jnp.tanh(pool_max(y, l2)).reshape(l2 * c1, nb)
        # convo_2
        z = jnp.dot(w2_ref[...], y.astype(jnp.bfloat16),
                    preferred_element_type=jnp.float32) + b2_
        # pooling_2 (ceil) -> leaky relu
        z = _lrelu(pool_max(z, l3)).reshape(l3 * c1, nb)
        # hidden_1: single contraction over the whole (c1*l3) flatten.
        h = _lrelu(jnp.dot(wh_ref[...], z.astype(jnp.bfloat16),
                           preferred_element_type=jnp.float32) + bh_)
        # lyr_out
        s = jnp.dot(wo_ref[...], h.astype(jnp.bfloat16),
                    preferred_element_type=jnp.float32) + bo_
        # training-with-dw-mask blend (f32, batch on lanes, lane-dense store)
        dw = dwrf_ref[0:odim, :]
        r = dwrf_ref[odim:2 * odim, :]
        d = s - r
        out_ref[...] = r * dw + (1.0 - dw) * s + jnp.maximum(d * dw, 0.0)

    full = lambda arr: pl.BlockSpec(arr.shape, lambda b: (0, 0))

    out = pl.pallas_call(
        kernel,
        out_shape=jax.ShapeDtypeStruct((odim, b_pad), jnp.float32),
        grid_spec=pltpu.PrefetchScalarGridSpec(
            num_scalar_prefetch=0,
            grid=(b_pad // tb,),
            in_specs=[
                pl.BlockSpec((tb, L * c_in), lambda b: (b, 0)),   # x, batch rows
                full(w1t), full(w2t), full(whp), full(wob),       # weights
                full(bias_all),                                   # all biases
                pl.BlockSpec((2 * odim, tb), lambda b: (0, b)),   # [dw; ref]
            ],
            out_specs=pl.BlockSpec((odim, tb), lambda b: (0, b)),
        ),
        compiler_params=pltpu.CompilerParams(
            dimension_semantics=("parallel",)),
    )(x_mat, w1t, w2t, whp, wob, bias_all, dwrf)
    return out[:, :B].T


def reference_forward(src, dw_filter, ref, params):
    """Layer-by-layer JAX mirror of the PyTorch forward.

    Matmul/conv operands are cast to bf16 (f32 accumulation) to match the
    kernel's MXU precision; all elementwise math stays f32.
    """
    q = lambda a: a.astype(jnp.bfloat16)
    x = jnp.transpose(src, (0, 2, 1)).astype(jnp.float32)        # (B, Cin, L)

    def conv1d(v, w, b):
        K = w.shape[-1]
        lout = v.shape[-1] - K + 1
        y = jnp.zeros((v.shape[0], w.shape[0], lout), jnp.float32)
        for k in range(K):
            y = y + jnp.einsum("oc,bcl->bol", q(w[:, :, k]),
                               q(v[:, :, k:k + lout]),
                               preferred_element_type=jnp.float32)
        return y + b[None, :, None]

    def maxpool_ceil(v, k=K_POOL):
        Lc = v.shape[-1]
        lout = -(-Lc // k)
        vp = jnp.pad(v, ((0, 0), (0, 0), (0, lout * k - Lc)),
                     constant_values=-jnp.inf)
        return jnp.max(vp.reshape(v.shape[0], v.shape[1], lout, k), axis=-1)

    y = jnp.tanh(maxpool_ceil(conv1d(x, params["w1"], params["b1"])))
    z = _lrelu(maxpool_ceil(conv1d(y, params["w2"], params["b2"])))
    flat = z.reshape(z.shape[0], -1)                 # channel-major flatten
    h = _lrelu(jnp.dot(q(flat), q(params["wh"].T),
                       preferred_element_type=jnp.float32) + params["bh"])
    s = jnp.dot(q(h), q(params["wo"].T),
                preferred_element_type=jnp.float32) + params["bo"]
    dw = dw_filter
    return ref * dw + (1.0 - dw) * s + jnp.maximum(s * dw - ref * dw, 0.0)


if __name__ == "__main__":
    # model_structure = [in_ch, conv_ch, hidden, ..., out]; seq_h*4 = input len
    model_structure = [4, 8, 32, 16, 8]
    seq_h = 8
    c_in, c1 = model_structure[0], model_structure[1]
    hdim, odim = model_structure[-3], model_structure[-1]
    L = seq_h * 4
    dim_past = lambda d: -(-(d - (K_CONV - 1)) // K_POOL)
    flat_dim = dim_past(dim_past(L)) * c1

    key = jax.random.PRNGKey(0)
    ks = jax.random.split(key, 14)
    params = {
        "w1": 0.2 * jax.random.normal(ks[0], (c1, c_in, K_CONV), jnp.float32),
        "b1": 0.1 * jax.random.normal(ks[1], (c1,), jnp.float32),
        "w2": 0.2 * jax.random.normal(ks[2], (c1, c1, K_CONV), jnp.float32),
        "b2": 0.1 * jax.random.normal(ks[3], (c1,), jnp.float32),
        "wh": 0.2 * jax.random.normal(ks[4], (hdim, flat_dim), jnp.float32),
        "bh": 0.1 * jax.random.normal(ks[5], (hdim,), jnp.float32),
        "wo": 0.2 * jax.random.normal(ks[6], (odim, hdim), jnp.float32),
        "bo": 0.1 * jax.random.normal(ks[7], (odim,), jnp.float32),
    }

    def check(B, k_src, k_dw, k_ref):
        src = jax.random.normal(k_src, (B, L, c_in), jnp.float32)
        dw_filter = (jax.random.uniform(k_dw, (B, odim)) > 0.5).astype(jnp.float32)
        ref = jax.random.normal(k_ref, (B, odim), jnp.float32)
        out = jax.block_until_ready(
            convo_model2rls_forward(src, dw_filter, ref, params))
        expected = jax.block_until_ready(
            reference_forward(src, dw_filter, ref, params))
        assert out.shape == (B, odim)
        # Both sides use bf16 MXU operands with f32 accumulation; agreement is
        # typically ~1e-6.  The margin covers rare bf16 re-quantization
        # (rounding-boundary) flips between the fused and layered forms and
        # f32 accumulation-order differences.
        if not jnp.allclose(out, expected, atol=5e-3, rtol=5e-3):
            raise AssertionError(
                f"Pallas kernel output mismatch vs JAX reference (B={B})")

    # Small-batch latency path (tb=128, single grid step).
    check(2, ks[8], ks[9], ks[10])
    # Larger batch exercising the adaptive tile and the >=2-step parallel grid
    # (tb=256, 2 grid steps -> both v7x TensorCores get work).
    check(260, ks[11], ks[12], ks[13])

    print("KERNEL_OK")
</pallas_src>

<mosaic_0001>
module attributes {stable_mosaic.version = 11 : i64} {
  func.func @kernel(%arg0: i32, %arg1: memref<128x128xf32, #tpu.memory_space<vmem>>, %arg2: memref<240x128xbf16, #tpu.memory_space<vmem>>, %arg3: memref<72x80xbf16, #tpu.memory_space<vmem>>, %arg4: memref<32x24xbf16, #tpu.memory_space<vmem>>, %arg5: memref<8x32xbf16, #tpu.memory_space<vmem>>, %arg6: memref<352x1xf32, #tpu.memory_space<vmem>>, %arg7: memref<16x128xf32, #tpu.memory_space<vmem>>, %arg8: memref<8x128xf32, #tpu.memory_space<vmem>>) attributes {dimension_semantics = [#tpu.dimension_semantics<parallel>], iteration_bounds = array<i64: 1>, scalar_prefetch = 0 : i64, scratch_operands = 0 : i64, tpu.core_type = #tpu.core_type<tc>, window_params = [{transform_indices = @transform_0, window_bounds = array<i64: 128, 128>}, {pipeline_mode = #tpu.pipeline_mode<synchronous>, transform_indices = @transform_1, window_bounds = array<i64: 240, 128>}, {pipeline_mode = #tpu.pipeline_mode<synchronous>, transform_indices = @transform_2, window_bounds = array<i64: 72, 80>}, {pipeline_mode = #tpu.pipeline_mode<synchronous>, transform_indices = @transform_3, window_bounds = array<i64: 32, 24>}, {pipeline_mode = #tpu.pipeline_mode<synchronous>, transform_indices = @transform_4, window_bounds = array<i64: 8, 32>}, {pipeline_mode = #tpu.pipeline_mode<synchronous>, transform_indices = @transform_5, window_bounds = array<i64: 352, 1>}, {transform_indices = @transform_6, window_bounds = array<i64: 16, 128>}, {transform_indices = @transform_7, window_bounds = array<i64: 8, 128>}]} {
    %c0 = arith.constant 0 : index
    %c0_0 = arith.constant 0 : index
    %0 = vector.load %arg6[%c0, %c0_0] : memref<352x1xf32, #tpu.memory_space<vmem>>, vector<352x1xf32>
    %1 = vector.extract_strided_slice %0 {offsets = [0, 0], sizes = [240, 1], strides = [1, 1]} : vector<352x1xf32> to vector<240x1xf32>
    %2 = vector.extract_strided_slice %0 {offsets = [240, 0], sizes = [72, 1], strides = [1, 1]} : vector<352x1xf32> to vector<72x1xf32>
    %3 = vector.extract_strided_slice %0 {offsets = [312, 0], sizes = [32, 1], strides = [1, 1]} : vector<352x1xf32> to vector<32x1xf32>
    %4 = vector.extract_strided_slice %0 {offsets = [344, 0], sizes = [8, 1], strides = [1, 1]} : vector<352x1xf32> to vector<8x1xf32>
    %c0_1 = arith.constant 0 : index
    %c0_2 = arith.constant 0 : index
    %5 = vector.load %arg1[%c0_1, %c0_2] : memref<128x128xf32, #tpu.memory_space<vmem>>, vector<128x128xf32>
    %6 = arith.truncf %5 : vector<128x128xf32> to vector<128x128xbf16>
    %c0_3 = arith.constant 0 : index
    %c0_4 = arith.constant 0 : index
    %7 = vector.load %arg2[%c0_3, %c0_4] : memref<240x128xbf16, #tpu.memory_space<vmem>>, vector<240x128xbf16>
    %cst = arith.constant dense<0.000000e+00> : vector<240x128xf32>
    %8 = tpu.matmul %7, %6, %cst {dimension_numbers = #tpu.dot_dimension_numbers<[1], [1], [0], [0], [0, 0, 1, 0], [], []>} : vector<240x128xbf16>, vector<128x128xbf16>, vector<240x128xf32> -> vector<240x128xf32>
    %9 = vector.broadcast %1 : vector<240x1xf32> to vector<240x128xf32>
    %10 = arith.addf %8, %9 : vector<240x128xf32>
    %11 = vector.shape_cast %10 : vector<240x128xf32> to vector<10x24x128xf32>
    %12 = vector.extract_strided_slice %11 {offsets = [0, 0, 0], sizes = [10, 8, 128], strides = [1, 1, 1]} : vector<10x24x128xf32> to vector<10x8x128xf32>
    %13 = vector.extract_strided_slice %11 {offsets = [0, 8, 0], sizes = [10, 8, 128], strides = [1, 1, 1]} : vector<10x24x128xf32> to vector<10x8x128xf32>
    %14 = arith.maximumf %12, %13 : vector<10x8x128xf32>
    %15 = vector.extract_strided_slice %11 {offsets = [0, 16, 0], sizes = [10, 8, 128], strides = [1, 1, 1]} : vector<10x24x128xf32> to vector<10x8x128xf32>
    %16 = arith.maximumf %14, %15 : vector<10x8x128xf32>
    %17 = math.tanh %16 : vector<10x8x128xf32>
    %18 = vector.shape_cast %17 : vector<10x8x128xf32> to vector<80x128xf32>
    %c0_5 = arith.constant 0 : index
    %c0_6 = arith.constant 0 : index
    %19 = vector.load %arg3[%c0_5, %c0_6] : memref<72x80xbf16, #tpu.memory_space<vmem>>, vector<72x80xbf16>
    %20 = arith.truncf %18 : vector<80x128xf32> to vector<80x128xbf16>
    %cst_7 = arith.constant dense<0.000000e+00> : vector<72x128xf32>
    %21 = tpu.matmul %19, %20, %cst_7 {dimension_numbers = #tpu.dot_dimension_numbers<[1], [0], [0], [1], [0, 0, 1, 1], [], []>} : vector<72x80xbf16>, vector<80x128xbf16>, vector<72x128xf32> -> vector<72x128xf32>
    %22 = vector.broadcast %2 : vector<72x1xf32> to vector<72x128xf32>
    %23 = arith.addf %21, %22 : vector<72x128xf32>
    %24 = vector.shape_cast %23 : vector<72x128xf32> to vector<3x24x128xf32>
    %25 = vector.extract_strided_slice %24 {offsets = [0, 0, 0], sizes = [3, 8, 128], strides = [1, 1, 1]} : vector<3x24x128xf32> to vector<3x8x128xf32>
    %26 = vector.extract_strided_slice %24 {offsets = [0, 8, 0], sizes = [3, 8, 128], strides = [1, 1, 1]} : vector<3x24x128xf32> to vector<3x8x128xf32>
    %27 = arith.maximumf %25, %26 : vector<3x8x128xf32>
    %28 = vector.extract_strided_slice %24 {offsets = [0, 16, 0], sizes = [3, 8, 128], strides = [1, 1, 1]} : vector<3x24x128xf32> to vector<3x8x128xf32>
    %29 = arith.maximumf %27, %28 : vector<3x8x128xf32>
    %cst_8 = arith.constant 0.000000e+00 : f32
    %30 = vector.broadcast %cst_8 : f32 to vector<3x8x128xf32>
    %31 = arith.cmpf oge, %29, %30 : vector<3x8x128xf32>
    %cst_9 = arith.constant 0.00999999977 : f32
    %32 = vector.broadcast %cst_9 : f32 to vector<3x8x128xf32>
    %33 = arith.mulf %32, %29 : vector<3x8x128xf32>
    %34 = arith.select %31, %29, %33 : vector<3x8x128xi1>, vector<3x8x128xf32>
    %35 = vector.shape_cast %34 : vector<3x8x128xf32> to vector<24x128xf32>
    %c0_10 = arith.constant 0 : index
    %c0_11 = arith.constant 0 : index
    %36 = vector.load %arg4[%c0_10, %c0_11] : memref<32x24xbf16, #tpu.memory_space<vmem>>, vector<32x24xbf16>
    %37 = arith.truncf %35 : vector<24x128xf32> to vector<24x128xbf16>
    %cst_12 = arith.constant dense<0.000000e+00> : vector<32x128xf32>
    %38 = tpu.matmul %36, %37, %cst_12 {dimension_numbers = #tpu.dot_dimension_numbers<[1], [0], [0], [1], [0, 0, 1, 1], [], []>} : vector<32x24xbf16>, vector<24x128xbf16>, vector<32x128xf32> -> vector<32x128xf32>
    %39 = vector.broadcast %3 : vector<32x1xf32> to vector<32x128xf32>
    %40 = arith.addf %38, %39 : vector<32x128xf32>
    %cst_13 = arith.constant 0.000000e+00 : f32
    %41 = vector.broadcast %cst_13 : f32 to vector<32x128xf32>
    %42 = arith.cmpf oge, %40, %41 : vector<32x128xf32>
    %cst_14 = arith.constant 0.00999999977 : f32
    %43 = vector.broadcast %cst_14 : f32 to vector<32x128xf32>
    %44 = arith.mulf %43, %40 : vector<32x128xf32>
    %45 = arith.select %42, %40, %44 : vector<32x128xi1>, vector<32x128xf32>
    %c0_15 = arith.constant 0 : index
    %c0_16 = arith.constant 0 : index
    %46 = vector.load %arg5[%c0_15, %c0_16] : memref<8x32xbf16, #tpu.memory_space<vmem>>, vector<8x32xbf16>
    %47 = arith.truncf %45 : vector<32x128xf32> to vector<32x128xbf16>
    %cst_17 = arith.constant dense<0.000000e+00> : vector<8x128xf32>
    %48 = tpu.matmul %46, %47, %cst_17 {dimension_numbers = #tpu.dot_dimension_numbers<[1], [0], [0], [1], [0, 0, 1, 1], [], []>} : vector<8x32xbf16>, vector<32x128xbf16>, vector<8x128xf32> -> vector<8x128xf32>
    %49 = vector.broadcast %4 : vector<8x1xf32> to vector<8x128xf32>
    %50 = arith.addf %48, %49 : vector<8x128xf32>
    %c0_18 = arith.constant 0 : index
    %c0_19 = arith.constant 0 : index
    %51 = vector.load %arg7[%c0_18, %c0_19] : memref<16x128xf32, #tpu.memory_space<vmem>>, vector<8x128xf32>
    %c8 = arith.constant 8 : index
    %c0_20 = arith.constant 0 : index
    %52 = vector.load %arg7[%c8, %c0_20] : memref<16x128xf32, #tpu.memory_space<vmem>>, vector<8x128xf32>
    %53 = arith.subf %50, %52 : vector<8x128xf32>
    %54 = arith.mulf %52, %51 : vector<8x128xf32>
    %cst_21 = arith.constant 1.000000e+00 : f32
    %55 = vector.broadcast %cst_21 : f32 to vector<8x128xf32>
    %56 = arith.subf %55, %51 : vector<8x128xf32>
    %57 = arith.mulf %56, %50 : vector<8x128xf32>
    %58 = arith.addf %54, %57 : vector<8x128xf32>
    %59 = arith.mulf %53, %51 : vector<8x128xf32>
    %cst_22 = arith.constant 0.000000e+00 : f32
    %60 = vector.broadcast %cst_22 : f32 to vector<8x128xf32>
    %61 = arith.maximumf %59, %60 : vector<8x128xf32>
    %62 = arith.addf %58, %61 : vector<8x128xf32>
    %c0_23 = arith.constant 0 : index
    %c0_24 = arith.constant 0 : index
    %63 = vector.load %arg8[%c0_23, %c0_24] : memref<8x128xf32, #tpu.memory_space<vmem>>, vector<8x128xf32>
    tpu.vector_store %arg8[%c0_23, %c0_24], %62 {strides = array<i32>} : memref<8x128xf32, #tpu.memory_space<vmem>>, vector<8x128xf32>,
    return
  }
  func.func @transform_0(%arg0: i32) -> (i32, i32) {
    %c0_i32 = arith.constant 0 : i32
    %c0_i32_0 = arith.constant 0 : i32
    return %arg0, %c0_i32 : i32, i32
  }
  func.func @transform_1(%arg0: i32) -> (i32, i32) {
    %c0_i32 = arith.constant 0 : i32
    %c0_i32_0 = arith.constant 0 : i32
    %c0_i32_1 = arith.constant 0 : i32
    return %c0_i32, %c0_i32_0 : i32, i32
  }
  func.func @transform_2(%arg0: i32) -> (i32, i32) {
    %c0_i32 = arith.constant 0 : i32
    %c0_i32_0 = arith.constant 0 : i32
    %c0_i32_1 = arith.constant 0 : i32
    return %c0_i32, %c0_i32_0 : i32, i32
  }
  func.func @transform_3(%arg0: i32) -> (i32, i32) {
    %c0_i32 = arith.constant 0 : i32
    %c0_i32_0 = arith.constant 0 : i32
    %c0_i32_1 = arith.constant 0 : i32
    return %c0_i32, %c0_i32_0 : i32, i32
  }
  func.func @transform_4(%arg0: i32) -> (i32, i32) {
    %c0_i32 = arith.constant 0 : i32
    %c0_i32_0 = arith.constant 0 : i32
    %c0_i32_1 = arith.constant 0 : i32
    return %c0_i32, %c0_i32_0 : i32, i32
  }
  func.func @transform_5(%arg0: i32) -> (i32, i32) {
    %c0_i32 = arith.constant 0 : i32
    %c0_i32_0 = arith.constant 0 : i32
    %c0_i32_1 = arith.constant 0 : i32
    return %c0_i32, %c0_i32_0 : i32, i32
  }
  func.func @transform_6(%arg0: i32) -> (i32, i32) {
    %c0_i32 = arith.constant 0 : i32
    %c0_i32_0 = arith.constant 0 : i32
    return %c0_i32, %arg0 : i32, i32
  }
  func.func @transform_7(%arg0: i32) -> (i32, i32) {
    %c0_i32 = arith.constant 0 : i32
    %c0_i32_0 = arith.constant 0 : i32
    return %c0_i32, %arg0 : i32, i32
  }
}

</mosaic_0001>

<llo_original>
// kernel: tpu_custom_call.1
$region0: #{tpu_custom_call.1}
  #allocation0 [shape = 'u32[]', space=smem, size = 0x4, offset = 0x4, fixed_abs, tag = 'smem constant byte address 0x4 - core index']
  #allocation1 [shape = 'u32[72,128]{1,0:T(1,128)}', space=vmem, size = 0x9000, scoped, tag = 'internal scratch']
  %s0 = inlined_call_operand.vmem [shape: f32[128,128], index: 0, kind: input, shape index: {}]
  %s1 = inlined_call_operand.vmem [shape: bf16[240,128], index: 1, kind: input, shape index: {}]
  %s2 = inlined_call_operand.vmem [shape: bf16[72,80], index: 2, kind: input, shape index: {}]
  %s3 = inlined_call_operand.vmem [shape: bf16[32,24], index: 3, kind: input, shape index: {}]
  %s4 = inlined_call_operand.vmem [shape: bf16[8,32], index: 4, kind: input, shape index: {}]
  %s5 = inlined_call_operand.vmem [shape: f32[352,1], index: 5, kind: input, shape index: {}]
  %s6 = inlined_call_operand.vmem [shape: f32[16,128], index: 6, kind: input, shape index: {}]
  %s7 = inlined_call_operand.hbm [shape: f32[8,128], index: 7, kind: output, shape index: {}]
  %s8 = sld [smem:[#allocation0]]
  $region38: #{tpu_custom_call.1} parent=0
    _
  %s10 = ssub.s32 1, %s8
  %s11 = scalar_select 0, %s10, %s8
  $region1: #{tpu_custom_call.1} parent=0
    #allocation2 [shape = 'u8[4096]{0}', space=vmem, size = 0x1000, scoped, tag = 'output window, operand 0, single buffered']
    #allocation3 [shape = 's32[1]{0}', space=sflag, size = 0x4, scoped, tag = 'scoped memory for tpu_custom_call.1']
    %12 = vsyncpa [#allocation3], 0
    // Predicated region
    $region2: #{tpu_custom_call.1} parent=1 // pred_check
      _
    $region3: #{tpu_custom_call.1} parent=1 // pred_check_branch
      %14 = sbr.rel (0) target = $region5
    $region4: #{tpu_custom_call.1} parent=1 // pred_region
      _
    $region5: #{tpu_custom_call.1} parent=1 // pred_fallthru
      _
    // Predicated region
    $region6: #{tpu_custom_call.1} parent=1 // pred_check
      _
    $region7: #{tpu_custom_call.1} parent=1 // pred_check_branch
      %16 = sbr.rel (0) target = $region9
    $region8: #{tpu_custom_call.1} parent=1 // pred_region
      _
    $region9: #{tpu_custom_call.1} parent=1 // pred_fallthru
      _
    // Predicated region
    $region10: #{tpu_custom_call.1} parent=1 // pred_check
      _
    $region11: #{tpu_custom_call.1} parent=1 // pred_check_branch
      %18 = sbr.rel (0) target = $region13
    $region12: #{tpu_custom_call.1} parent=1 // pred_region
      _
    $region13: #{tpu_custom_call.1} parent=1 // pred_fallthru
      _
    // Predicated region
    $region14: #{tpu_custom_call.1} parent=1 // pred_check
      _
    $region15: #{tpu_custom_call.1} parent=1 // pred_check_branch
      %20 = sbr.rel (0) target = $region17
    $region16: #{tpu_custom_call.1} parent=1 // pred_region
      _
    $region17: #{tpu_custom_call.1} parent=1 // pred_fallthru
      _
    // Predicated region
    $region18: #{tpu_custom_call.1} parent=1 // pred_check
      _
    $region19: #{tpu_custom_call.1} parent=1 // pred_check_branch
      %22 = sbr.rel (0) target = $region21
    $region20: #{tpu_custom_call.1} parent=1 // pred_region
      _
    $region21: #{tpu_custom_call.1} parent=1 // pred_fallthru
      _
    // Predicated region
    $region22: #{tpu_custom_call.1} parent=1 // pred_check
      _
    $region23: #{tpu_custom_call.1} parent=1 // pred_check_branch
      %24 = sbr.rel (0) target = $region25
    $region24: #{tpu_custom_call.1} parent=1 // pred_region
      _
    $region25: #{tpu_custom_call.1} parent=1 // pred_fallthru
      _
    // Predicated region
    $region26: #{tpu_custom_call.1} parent=1 // pred_check
      _
    $region27: #{tpu_custom_call.1} parent=1 // pred_check_branch
      %26 = sbr.rel (0) target = $region29
    $region28: #{tpu_custom_call.1} parent=1 // pred_region
      _
    $region29: #{tpu_custom_call.1} parent=1 // pred_fallthru
      _
    %v28 = vld [vmem:[%s5] sm:$0xff]
    %v29 = vld [vmem:[%s5 + $0x8] sm:$0xff]
    %v30 = vld [vmem:[%s5 + $0x10] sm:$0xff]
    %v31 = vld [vmem:[%s5 + $0x18] sm:$0xff]
    %v32 = vld [vmem:[%s5 + $0x20] sm:$0xff]
    %v33 = vld [vmem:[%s5 + $0x28] sm:$0xff]
    %v34 = vld [vmem:[%s5 + $0x30] sm:$0xff]
    %v35 = vld [vmem:[%s5 + $0x38] sm:$0xff]
    %v36 = vld [vmem:[%s5 + $0x40] sm:$0xff]
    %v37 = vld [vmem:[%s5 + $0x48] sm:$0xff]
    %v38 = vld [vmem:[%s5 + $0x50] sm:$0xff]
    %v39 = vld [vmem:[%s5 + $0x58] sm:$0xff]
    %v40 = vld [vmem:[%s5 + $0x60] sm:$0xff]
    %v41 = vld [vmem:[%s5 + $0x68] sm:$0xff]
    %v42 = vld [vmem:[%s5 + $0x70] sm:$0xff]
    %v43 = vld [vmem:[%s5 + $0x78] sm:$0xff]
    %v44 = vld [vmem:[%s5 + $0x80] sm:$0xff]
    %v45 = vld [vmem:[%s5 + $0x88] sm:$0xff]
    %v46 = vld [vmem:[%s5 + $0x90] sm:$0xff]
    %v47 = vld [vmem:[%s5 + $0x98] sm:$0xff]
    %v48 = vld [vmem:[%s5 + $0xa0] sm:$0xff]
    %v49 = vld [vmem:[%s5 + $0xa8] sm:$0xff]
    %v50 = vld [vmem:[%s5 + $0xb0] sm:$0xff]
    %v51 = vld [vmem:[%s5 + $0xb8] sm:$0xff]
    %v52 = vld [vmem:[%s5 + $0xc0] sm:$0xff]
    %v53 = vld [vmem:[%s5 + $0xc8] sm:$0xff]
    %v54 = vld [vmem:[%s5 + $0xd0] sm:$0xff]
    %v55 = vld [vmem:[%s5 + $0xd8] sm:$0xff]
    %v56 = vld [vmem:[%s5 + $0xe0] sm:$0xff]
    %v57 = vld [vmem:[%s5 + $0xe8] sm:$0xff]
    %v58 = vld [vmem:[%s5 + $0xf0] sm:$0xff]
    %v59 = vld [vmem:[%s5 + $0xf8] sm:$0xff]
    %v60 = vld [vmem:[%s5 + $0x100] sm:$0xff]
    %v61 = vld [vmem:[%s5 + $0x108] sm:$0xff]
    %v62 = vld [vmem:[%s5 + $0x110] sm:$0xff]
    %v63 = vld [vmem:[%s5 + $0x118] sm:$0xff]
    %v64 = vld [vmem:[%s5 + $0x120] sm:$0xff]
    %v65 = vld [vmem:[%s5 + $0x128] sm:$0xff]
    %v66 = vld [vmem:[%s5 + $0x130] sm:$0xff]
    %v67 = vld [vmem:[%s5 + $0x138] sm:$0xff]
    %v68 = vld [vmem:[%s5 + $0x140] sm:$0xff]
    %v69 = vld [vmem:[%s5 + $0x148] sm:$0xff]
    %v70 = vld [vmem:[%s5 + $0x150] sm:$0xff]
    %v71 = vld [vmem:[%s5 + $0x158] sm:$0xff]
    %v72 = vld [vmem:[%s0] sm:$0xff]
    %v73 = vld [vmem:[%s0 + $0x8] sm:$0xff]
    %v74 = vld [vmem:[%s0 + $0x10] sm:$0xff]
    %v75 = vld [vmem:[%s0 + $0x18] sm:$0xff]
    %v76 = vld [vmem:[%s0 + $0x20] sm:$0xff]
    %v77 = vld [vmem:[%s0 + $0x28] sm:$0xff]
    %v78 = vld [vmem:[%s0 + $0x30] sm:$0xff]
    %v79 = vld [vmem:[%s0 + $0x38] sm:$0xff]
    %v80 = vld [vmem:[%s0 + $0x40] sm:$0xff]
    %v81 = vld [vmem:[%s0 + $0x48] sm:$0xff]
    %v82 = vld [vmem:[%s0 + $0x50] sm:$0xff]
    %v83 = vld [vmem:[%s0 + $0x58] sm:$0xff]
    %v84 = vld [vmem:[%s0 + $0x60] sm:$0xff]
    %v85 = vld [vmem:[%s0 + $0x68] sm:$0xff]
    %v86 = vld [vmem:[%s0 + $0x70] sm:$0xff]
    %v87 = vld [vmem:[%s0 + $0x78] sm:$0xff]
    %v88 = vpack.c.bf16 %v73, %v72
    %v89 = vpack.c.bf16 %v75, %v74
    %v90 = vpack.c.bf16 %v77, %v76
    %v91 = vpack.c.bf16 %v79, %v78
    %v92 = vpack.c.bf16 %v81, %v80
    %v93 = vpack.c.bf16 %v83, %v82
    %v94 = vpack.c.bf16 %v85, %v84
    %v95 = vpack.c.bf16 %v87, %v86
    %v96 = vld [vmem:[%s1] sm:$0xf]
    %v97 = vld [vmem:[%s1 + $0x4] sm:$0xf]
    %v98 = vld [vmem:[%s1 + $0x8] sm:$0xf]
    %v99 = vld [vmem:[%s1 + $0xc] sm:$0xf]
    %v100 = vld [vmem:[%s1 + $0x10] sm:$0xf]
    %v101 = vld [vmem:[%s1 + $0x14] sm:$0xf]
    %v102 = vld [vmem:[%s1 + $0x18] sm:$0xf]
    %v103 = vld [vmem:[%s1 + $0x1c] sm:$0xf]
    %v104 = vld [vmem:[%s1 + $0x20] sm:$0xf]
    %v105 = vld [vmem:[%s1 + $0x24] sm:$0xf]
    %v106 = vld [vmem:[%s1 + $0x28] sm:$0xf]
    %v107 = vld [vmem:[%s1 + $0x2c] sm:$0xf]
    %v108 = vld [vmem:[%s1 + $0x30] sm:$0xf]
    %v109 = vld [vmem:[%s1 + $0x34] sm:$0xf]
    %v110 = vld [vmem:[%s1 + $0x38] sm:$0xf]
    %v111 = vld [vmem:[%s1 + $0x3c] sm:$0xf]
    %v112 = vld [vmem:[%s1 + $0x40] sm:$0xf]
    %v113 = vld [vmem:[%s1 + $0x44] sm:$0xf]
    %v114 = vld [vmem:[%s1 + $0x48] sm:$0xf]
    %v115 = vld [vmem:[%s1 + $0x4c] sm:$0xf]
    %v116 = vld [vmem:[%s1 + $0x50] sm:$0xf]
    %v117 = vld [vmem:[%s1 + $0x54] sm:$0xf]
    %v118 = vld [vmem:[%s1 + $0x58] sm:$0xf]
    %v119 = vld [vmem:[%s1 + $0x5c] sm:$0xf]
    %v120 = vld [vmem:[%s1 + $0x60] sm:$0xf]
    %v121 = vld [vmem:[%s1 + $0x64] sm:$0xf]
    %v122 = vld [vmem:[%s1 + $0x68] sm:$0xf]
    %v123 = vld [vmem:[%s1 + $0x6c] sm:$0xf]
    %v124 = vld [vmem:[%s1 + $0x70] sm:$0xf]
    %v125 = vld [vmem:[%s1 + $0x74] sm:$0xf]
    %127 = vset.pattern.permute.xlu0 0
    %128 = vperm.xlu0 %127, %v28
    %v129 = vpop.permute.xlu0 %128
    %132 = vset.pattern.permute.xlu0 0
    %133 = vperm.xlu0 %132, %v29
    %v134 = vpop.permute.xlu0 %133
    %137 = vset.pattern.permute.xlu0 0
    %138 = vperm.xlu0 %137, %v30
    %v139 = vpop.permute.xlu0 %138
    %142 = vset.pattern.permute.xlu0 0
    %143 = vperm.xlu0 %142, %v31
    %v144 = vpop.permute.xlu0 %143
    %147 = vset.pattern.permute.xlu0 0
    %148 = vperm.xlu0 %147, %v32
    %v149 = vpop.permute.xlu0 %148
    %152 = vset.pattern.permute.xlu0 0
    %153 = vperm.xlu0 %152, %v33
    %v154 = vpop.permute.xlu0 %153
    %157 = vset.pattern.permute.xlu0 0
    %158 = vperm.xlu0 %157, %v34
    %v159 = vpop.permute.xlu0 %158
    %162 = vset.pattern.permute.xlu0 0
    %163 = vperm.xlu0 %162, %v35
    %v164 = vpop.permute.xlu0 %163
    %167 = vset.pattern.permute.xlu0 0
    %168 = vperm.xlu0 %167, %v36
    %v169 = vpop.permute.xlu0 %168
    %172 = vset.pattern.permute.xlu0 0
    %173 = vperm.xlu0 %172, %v37
    %v174 = vpop.permute.xlu0 %173
    %177 = vset.pattern.permute.xlu0 0
    %178 = vperm.xlu0 %177, %v38
    %v179 = vpop.permute.xlu0 %178
    %182 = vset.pattern.permute.xlu0 0
    %183 = vperm.xlu0 %182, %v39
    %v184 = vpop.permute.xlu0 %183
    %187 = vset.pattern.permute.xlu0 0
    %188 = vperm.xlu0 %187, %v40
    %v189 = vpop.permute.xlu0 %188
    %192 = vset.pattern.permute.xlu0 0
    %193 = vperm.xlu0 %192, %v41
    %v194 = vpop.permute.xlu0 %193
    %197 = vset.pattern.permute.xlu0 0
    %198 = vperm.xlu0 %197, %v42
    %v199 = vpop.permute.xlu0 %198
    %202 = vset.pattern.permute.xlu0 0
    %203 = vperm.xlu0 %202, %v43
    %v204 = vpop.permute.xlu0 %203
    %207 = vset.pattern.permute.xlu0 0
    %208 = vperm.xlu0 %207, %v44
    %v209 = vpop.permute.xlu0 %208
    %212 = vset.pattern.permute.xlu0 0
    %213 = vperm.xlu0 %212, %v45
    %v214 = vpop.permute.xlu0 %213
    %217 = vset.pattern.permute.xlu0 0
    %218 = vperm.xlu0 %217, %v46
    %v219 = vpop.permute.xlu0 %218
    %222 = vset.pattern.permute.xlu0 0
    %223 = vperm.xlu0 %222, %v47
    %v224 = vpop.permute.xlu0 %223
    %227 = vset.pattern.permute.xlu0 0
    %228 = vperm.xlu0 %227, %v48
    %v229 = vpop.permute.xlu0 %228
    %232 = vset.pattern.permute.xlu0 0
    %233 = vperm.xlu0 %232, %v49
    %v234 = vpop.permute.xlu0 %233
    %237 = vset.pattern.permute.xlu0 0
    %238 = vperm.xlu0 %237, %v50
    %v239 = vpop.permute.xlu0 %238
    %242 = vset.pattern.permute.xlu0 0
    %243 = vperm.xlu0 %242, %v51
    %v244 = vpop.permute.xlu0 %243
    %247 = vset.pattern.permute.xlu0 0
    %248 = vperm.xlu0 %247, %v52
    %v249 = vpop.permute.xlu0 %248
    %252 = vset.pattern.permute.xlu0 0
    %253 = vperm.xlu0 %252, %v53
    %v254 = vpop.permute.xlu0 %253
    %257 = vset.pattern.permute.xlu0 0
    %258 = vperm.xlu0 %257, %v54
    %v259 = vpop.permute.xlu0 %258
    %262 = vset.pattern.permute.xlu0 0
    %263 = vperm.xlu0 %262, %v55
    %v264 = vpop.permute.xlu0 %263
    %267 = vset.pattern.permute.xlu0 0
    %268 = vperm.xlu0 %267, %v56
    %v269 = vpop.permute.xlu0 %268
    %272 = vset.pattern.permute.xlu0 0
    %273 = vperm.xlu0 %272, %v57
    %v274 = vpop.permute.xlu0 %273
    %v306 = vunpack.c.l.b16 %v96
    %v307 = vunpack.c.l.b16 %v97
    %v308 = vunpack.c.l.b16 %v98
    %v309 = vunpack.c.l.b16 %v99
    %v310 = vunpack.c.l.b16 %v100
    %v311 = vunpack.c.l.b16 %v101
    %v312 = vunpack.c.l.b16 %v102
    %v313 = vunpack.c.l.b16 %v103
    %v314 = vunpack.c.l.b16 %v104
    %v315 = vunpack.c.l.b16 %v105
    %v316 = vunpack.c.l.b16 %v106
    %v317 = vunpack.c.l.b16 %v107
    %v318 = vunpack.c.l.b16 %v108
    %v319 = vunpack.c.l.b16 %v109
    %v320 = vunpack.c.l.b16 %v110
    %v321 = vunpack.c.l.b16 %v111
    %v322 = vunpack.c.l.b16 %v112
    %v323 = vunpack.c.l.b16 %v113
    %v324 = vunpack.c.l.b16 %v114
    %v325 = vunpack.c.l.b16 %v115
    %v326 = vunpack.c.l.b16 %v116
    %v327 = vunpack.c.l.b16 %v117
    %v328 = vunpack.c.l.b16 %v118
    %v329 = vunpack.c.l.b16 %v119
    %v330 = vunpack.c.l.b16 %v120
    %v331 = vunpack.c.l.b16 %v121
    %v332 = vunpack.c.l.b16 %v122
    %v333 = vunpack.c.l.b16 %v123
    %v334 = vunpack.c.l.b16 %v124
    %v335 = vunpack.c.l.b16 %v125
    %v336 = vpack.c.b16 %v307, %v306
    %v337 = vpack.c.b16 %v309, %v308
    %v338 = vpack.c.b16 %v311, %v310
    %v339 = vpack.c.b16 %v313, %v312
    %v340 = vpack.c.b16 %v315, %v314
    %v341 = vpack.c.b16 %v317, %v316
    %v342 = vpack.c.b16 %v319, %v318
    %v343 = vpack.c.b16 %v321, %v320
    %v344 = vpack.c.b16 %v323, %v322
    %v345 = vpack.c.b16 %v325, %v324
    %v346 = vpack.c.b16 %v327, %v326
    %v347 = vpack.c.b16 %v329, %v328
    %v348 = vpack.c.b16 %v331, %v330
    %v349 = vpack.c.b16 %v333, %v332
    %v350 = vpack.c.b16 %v335, %v334
    %366 = vmatpush.bf16.xpose.msra.mxu0 %v95
    %367 = vmatpush.bf16.xpose.msra.mxu0 %v94
    %368 = vmatpush.bf16.xpose.msra.mxu0 %v93
    %369 = vmatpush.bf16.xpose.msra.mxu0 %v92
    %370 = vmatpush.bf16.xpose.msra.mxu0 %v91
    %371 = vmatpush.bf16.xpose.msra.mxu0 %v90
    %372 = vmatpush.bf16.xpose.msra.mxu0 %v89
    %373 = vmatpush.bf16.xpose.msra.mxu0 %v88
    %374 = vmatmul.bf16.gmra.mxu0 %v336
    %v375 = vpop.f32.mrf.mxu0
    %v376 = vadd.f32 %v129, %v375
    %v377 = vpop.f32.mrf.mxu0
    %v378 = vadd.f32 %v134, %v377
    %379 = vmatmul.bf16.gmra.mxu0 %v337
    %v380 = vpop.f32.mrf.mxu0
    %v381 = vadd.f32 %v139, %v380
    %v382 = vpop.f32.mrf.mxu0
    %v383 = vadd.f32 %v144, %v382
    %384 = vmatmul.bf16.gmra.mxu0 %v338
    %v385 = vpop.f32.mrf.mxu0
    %v386 = vadd.f32 %v149, %v385
    %v387 = vpop.f32.mrf.mxu0
    %v388 = vadd.f32 %v154, %v387
    %389 = vmatmul.bf16.gmra.mxu0 %v339
    %v390 = vpop.f32.mrf.mxu0
    %v391 = vadd.f32 %v159, %v390
    %v392 = vpop.f32.mrf.mxu0
    %v393 = vadd.f32 %v164, %v392
    %394 = vmatmul.bf16.gmra.mxu0 %v340
    %v395 = vpop.f32.mrf.mxu0
    %v396 = vadd.f32 %v169, %v395
    %v397 = vpop.f32.mrf.mxu0
    %v398 = vadd.f32 %v174, %v397
    %399 = vmatmul.bf16.gmra.mxu0 %v341
    %v400 = vpop.f32.mrf.mxu0
    %v401 = vadd.f32 %v179, %v400
    %v402 = vpop.f32.mrf.mxu0
    %v403 = vadd.f32 %v184, %v402
    %404 = vmatmul.bf16.gmra.mxu0 %v342
    %v405 = vpop.f32.mrf.mxu0
    %v406 = vadd.f32 %v189, %v405
    %v407 = vpop.f32.mrf.mxu0
    %v408 = vadd.f32 %v194, %v407
    %409 = vmatmul.bf16.gmra.mxu0 %v343
    %v410 = vpop.f32.mrf.mxu0
    %v411 = vadd.f32 %v199, %v410
    %v412 = vpop.f32.mrf.mxu0
    %v413 = vadd.f32 %v204, %v412
    %414 = vmatmul.bf16.gmra.mxu0 %v344
    %v415 = vpop.f32.mrf.mxu0
    %v416 = vadd.f32 %v209, %v415
    %v417 = vpop.f32.mrf.mxu0
    %v418 = vadd.f32 %v214, %v417
    %419 = vmatmul.bf16.gmra.mxu0 %v345
    %v420 = vpop.f32.mrf.mxu0
    %v421 = vadd.f32 %v219, %v420
    %v422 = vpop.f32.mrf.mxu0
    %v423 = vadd.f32 %v224, %v422
    %424 = vmatmul.bf16.gmra.mxu0 %v346
    %v425 = vpop.f32.mrf.mxu0
    %v426 = vadd.f32 %v229, %v425
    %v427 = vpop.f32.mrf.mxu0
    %v428 = vadd.f32 %v234, %v427
    %429 = vmatmul.bf16.gmra.mxu0 %v347
    %v430 = vpop.f32.mrf.mxu0
    %v431 = vadd.f32 %v239, %v430
    %v432 = vpop.f32.mrf.mxu0
    %v433 = vadd.f32 %v244, %v432
    %434 = vmatmul.bf16.gmra.mxu0 %v348
    %v435 = vpop.f32.mrf.mxu0
    %v436 = vadd.f32 %v249, %v435
    %v437 = vpop.f32.mrf.mxu0
    %v438 = vadd.f32 %v254, %v437
    %439 = vmatmul.bf16.gmra.mxu0 %v349
    %v440 = vpop.f32.mrf.mxu0
    %v441 = vadd.f32 %v259, %v440
    %v442 = vpop.f32.mrf.mxu0
    %v443 = vadd.f32 %v264, %v442
    %444 = vmatmul.bf16.gmra.mxu0 %v350
    %v445 = vpop.f32.mrf.mxu0
    %v446 = vadd.f32 %v269, %v445
    %v447 = vpop.f32.mrf.mxu0
    %v448 = vadd.f32 %v274, %v447
    %449 = vdwg.mxu0
    %v450 = vmax.f32 %v376, %v378
    %v451 = vmax.f32 %v383, %v386
    %v452 = vmax.f32 %v391, %v393
    %v453 = vmax.f32 %v398, %v401
    %v454 = vmax.f32 %v406, %v408
    %v455 = vmax.f32 %v413, %v416
    %v456 = vmax.f32 %v421, %v423
    %v457 = vmax.f32 %v428, %v431
    %v458 = vmax.f32 %v436, %v438
    %v459 = vmax.f32 %v443, %v446
    %v460 = vmax.f32 %v450, %v381
    %v461 = vmax.f32 %v451, %v388
    %v462 = vmax.f32 %v452, %v396
    %v463 = vmax.f32 %v453, %v403
    %v464 = vmax.f32 %v454, %v411
    %v465 = vmax.f32 %v455, %v418
    %v466 = vmax.f32 %v456, %v426
    %v467 = vmax.f32 %v457, %v433
    %v468 = vmax.f32 %v458, %v441
    %v469 = vmax.f32 %v459, %v448
    %v470 = vtanh.pop %v460
    %v471 = vtanh.pop %v461
    %v472 = vtanh.pop %v462
    %v473 = vtanh.pop %v463
    %v474 = vtanh.pop %v464
    %v475 = vtanh.pop %v465
    %v476 = vtanh.pop %v466
    %v477 = vtanh.pop %v467
    %v478 = vtanh.pop %v468
    %v479 = vtanh.pop %v469
    %v480 = vld [vmem:[%s2] sm:$0xf]
    %v481 = vld [vmem:[%s2 + $0x4] sm:$0xf]
    %v482 = vld [vmem:[%s2 + $0x8] sm:$0xf]
    %v483 = vld [vmem:[%s2 + $0xc] sm:$0xf]
    %v484 = vld [vmem:[%s2 + $0x10] sm:$0xf]
    %v485 = vld [vmem:[%s2 + $0x14] sm:$0xf]
    %v486 = vld [vmem:[%s2 + $0x18] sm:$0xf]
    %v487 = vld [vmem:[%s2 + $0x1c] sm:$0xf]
    %v488 = vld [vmem:[%s2 + $0x20] sm:$0xf]
    %v489 = vpack.c.bf16 %v471, %v470
    %v490 = vpack.c.bf16 %v473, %v472
    %v491 = vpack.c.bf16 %v475, %v474
    %v492 = vpack.c.bf16 %v477, %v476
    %v493 = vpack.c.bf16 %v479, %v478
    %495 = vset.pattern.permute.xlu0 0
    %496 = vperm.xlu0 %495, %v58
    %v497 = vpop.permute.xlu0 %496
    %500 = vset.pattern.permute.xlu0 0
    %501 = vperm.xlu0 %500, %v59
    %v502 = vpop.permute.xlu0 %501
    %505 = vset.pattern.permute.xlu0 0
    %506 = vperm.xlu0 %505, %v60
    %v507 = vpop.permute.xlu0 %506
    %510 = vset.pattern.permute.xlu0 0
    %511 = vperm.xlu0 %510, %v61
    %v512 = vpop.permute.xlu0 %511
    %515 = vset.pattern.permute.xlu0 0
    %516 = vperm.xlu0 %515, %v62
    %v517 = vpop.permute.xlu0 %516
    %520 = vset.pattern.permute.xlu0 0
    %521 = vperm.xlu0 %520, %v63
    %v522 = vpop.permute.xlu0 %521
    %525 = vset.pattern.permute.xlu0 0
    %526 = vperm.xlu0 %525, %v64
    %v527 = vpop.permute.xlu0 %526
    %530 = vset.pattern.permute.xlu0 0
    %531 = vperm.xlu0 %530, %v65
    %v532 = vpop.permute.xlu0 %531
    %535 = vset.pattern.permute.xlu0 0
    %536 = vperm.xlu0 %535, %v66
    %v537 = vpop.permute.xlu0 %536
    %v548 = vunpack.c.l.b16 %v480
    %v549 = vunpack.c.l.b16 %v481
    %v550 = vunpack.c.l.b16 %v482
    %v551 = vunpack.c.l.b16 %v483
    %v552 = vunpack.c.l.b16 %v484
    %v553 = vunpack.c.l.b16 %v485
    %v554 = vunpack.c.l.b16 %v486
    %v555 = vunpack.c.l.b16 %v487
    %v556 = vunpack.c.l.b16 %v488
    %v557 = vpack.c.b16 %v549, %v548
    %v558 = vpack.c.b16 %v551, %v550
    %v559 = vpack.c.b16 %v553, %v552
    %v560 = vpack.c.b16 %v555, %v554
    %v561 = vpack.c.b16 %v556, %v556
    %vm562 = vcmask 654336
    %v564 = vsel %vm562, %v557, 0
    %v567 = vsel %vm562, %v558, 0
    %v570 = vsel %vm562, %v559, 0
    %v573 = vsel %vm562, %v560, 0
    %v576 = vsel %vm562, %v561, 0
    %578 = vmatpush.bf16.msra.mxu0 0
    %579 = vmatpush.bf16.msra.mxu0 0
    %580 = vmatpush.bf16.msra.mxu0 0
    %581 = vmatpush.bf16.msra.mxu0 %v493
    %582 = vmatpush.bf16.msra.mxu0 %v492
    %583 = vmatpush.bf16.msra.mxu0 %v491
    %584 = vmatpush.bf16.msra.mxu0 %v490
    %585 = vmatpush.bf16.msra.mxu0 %v489
    %586 = vmatmul.bf16.gmra.mxu0 %v564
    %v587 = vpop.f32.mrf.mxu0
    %v588 = vadd.f32 %v497, %v587
    %v589 = vpop.f32.mrf.mxu0
    %v590 = vadd.f32 %v502, %v589
    %591 = vmatmul.bf16.gmra.mxu0 %v567
    %v592 = vpop.f32.mrf.mxu0
    %v593 = vadd.f32 %v507, %v592
    %v594 = vpop.f32.mrf.mxu0
    %v595 = vadd.f32 %v512, %v594
    %596 = vmatmul.bf16.gmra.mxu0 %v570
    %v597 = vpop.f32.mrf.mxu0
    %v598 = vadd.f32 %v517, %v597
    %v599 = vpop.f32.mrf.mxu0
    %v600 = vadd.f32 %v522, %v599
    %601 = vmatmul.bf16.gmra.mxu0 %v573
    %v602 = vpop.f32.mrf.mxu0
    %v603 = vadd.f32 %v527, %v602
    %v604 = vpop.f32.mrf.mxu0
    %v605 = vadd.f32 %v532, %v604
    %606 = vmatmul.bf16.gmra.mxu0 %v576
    %v607 = vpop.f32.mrf.mxu0
    %v608 = vadd.f32 %v537, %v607
    %v609 = vpop.f32.mrf.mxu0
    %610 = vdwg.mxu0
    %v611 = vmax.f32 %v588, %v590
    %v612 = vmax.f32 %v595, %v598
    %v613 = vmax.f32 %v603, %v605
    %v614 = vmax.f32 %v611, %v593
    %v615 = vmax.f32 %v612, %v600
    %v616 = vmax.f32 %v613, %v608
    %vm617 = vcmp.ge.f32.partialorder %v614, 0.0
    %vm618 = vcmp.ge.f32.partialorder %v615, 0.0
    %vm619 = vcmp.ge.f32.partialorder %v616, 0.0
    %v620 = vmul.f32 %v614, 0.01
    %v621 = vmul.f32 %v615, 0.01
    %v622 = vmul.f32 %v616, 0.01
    %v623 = vsel %vm617, %v614, %v620
    %v624 = vsel %vm618, %v615, %v621
    %v625 = vsel %vm619, %v616, %v622
    %v626 = vld [vmem:[%s3] sm:$0xf]
    %v627 = vld [vmem:[%s3 + $0x4] sm:$0xf]
    %v628 = vld [vmem:[%s3 + $0x8] sm:$0xf]
    %v629 = vld [vmem:[%s3 + $0xc] sm:$0xf]
    %v630 = vpack.c.bf16 %v624, %v623
    %v631 = vpack.c.bf16 %v625, %v625
    %633 = vset.pattern.permute.xlu0 0
    %634 = vperm.xlu0 %633, %v67
    %v635 = vpop.permute.xlu0 %634
    %638 = vset.pattern.permute.xlu0 0
    %639 = vperm.xlu0 %638, %v68
    %v640 = vpop.permute.xlu0 %639
    %643 = vset.pattern.permute.xlu0 0
    %644 = vperm.xlu0 %643, %v69
    %v645 = vpop.permute.xlu0 %644
    %648 = vset.pattern.permute.xlu0 0
    %649 = vperm.xlu0 %648, %v70
    %v650 = vpop.permute.xlu0 %649
    %v656 = vunpack.c.l.b16 %v626
    %v657 = vunpack.c.l.b16 %v627
    %v658 = vunpack.c.l.b16 %v628
    %v659 = vunpack.c.l.b16 %v629
    %v660 = vpack.c.b16 %v657, %v656
    %v661 = vpack.c.b16 %v659, %v658
    %vm662 = vcmask 195584
    %v664 = vsel %vm662, %v660, 0
    %v667 = vsel %vm662, %v661, 0
    %vm669 = vcmask 1043456
    %v671 = vsel %vm669, %v631, 0
    %673 = vmatpush.bf16.msra.mxu0 0
    %674 = vmatpush.bf16.msra.mxu0 0
    %675 = vmatpush.bf16.msra.mxu0 0
    %676 = vmatpush.bf16.msra.mxu0 0
    %677 = vmatpush.bf16.msra.mxu0 0
    %678 = vmatpush.bf16.msra.mxu0 0
    %679 = vmatpush.bf16.msra.mxu0 %v671
    %680 = vmatpush.bf16.msra.mxu0 %v630
    %681 = vmatmul.bf16.gmra.mxu0 %v664
    %v682 = vpop.f32.mrf.mxu0
    %v683 = vadd.f32 %v635, %v682
    %v684 = vpop.f32.mrf.mxu0
    %v685 = vadd.f32 %v640, %v684
    %686 = vmatmul.bf16.gmra.mxu0 %v667
    %v687 = vpop.f32.mrf.mxu0
    %v688 = vadd.f32 %v645, %v687
    %v689 = vpop.f32.mrf.mxu0
    %v690 = vadd.f32 %v650, %v689
    %691 = vdwg.mxu0
    %vm692 = vcmp.ge.f32.partialorder %v683, 0.0
    %vm693 = vcmp.ge.f32.partialorder %v685, 0.0
    %vm694 = vcmp.ge.f32.partialorder %v688, 0.0
    %vm695 = vcmp.ge.f32.partialorder %v690, 0.0
    %v696 = vmul.f32 %v683, 0.01
    %v697 = vmul.f32 %v685, 0.01
    %v698 = vmul.f32 %v688, 0.01
    %v699 = vmul.f32 %v690, 0.01
    %v700 = vsel %vm692, %v683, %v696
    %v701 = vsel %vm693, %v685, %v697
    %v702 = vsel %vm694, %v688, %v698
    %v703 = vsel %vm695, %v690, %v699
    %v704 = vld [vmem:[%s4] sm:$0xf]
    %v705 = vpack.c.bf16 %v701, %v700
    %v706 = vpack.c.bf16 %v703, %v702
    %708 = vset.pattern.permute.xlu0 0
    %709 = vperm.xlu0 %708, %v71
    %v710 = vpop.permute.xlu0 %709
    %vm712 = vcmask 261120
    %v714 = vsel %vm712, %v704, 0
    %716 = vmatpush.bf16.msra.mxu0 0
    %717 = vmatpush.bf16.msra.mxu0 0
    %718 = vmatpush.bf16.msra.mxu0 0
    %719 = vmatpush.bf16.msra.mxu0 0
    %720 = vmatpush.bf16.msra.mxu0 0
    %721 = vmatpush.bf16.msra.mxu0 0
    %722 = vmatpush.bf16.msra.mxu0 %v706
    %723 = vmatpush.bf16.msra.mxu0 %v705
    %724 = vmatmul.bf16.gmra.mxu0 %v714
    %v725 = vpop.f32.mrf.mxu0
    %v726 = vadd.f32 %v710, %v725
    %v727 = vpop.f32.mrf.mxu0
    %728 = vdwg.mxu0
    %v729 = vld [vmem:[%s6] sm:$0xff]
    %v730 = vld [vmem:[%s6 + $0x8] sm:$0xff]
    %v731 = vsub.f32 %v726, %v730
    %v732 = vmul.f32 %v730, %v729
    %v733 = vsub.f32 1.0, %v729
    %v734 = vmul.f32 %v733, %v726
    %v735 = vadd.f32 %v732, %v734
    %v736 = vmul.f32 %v731, %v729
    %v737 = vmax.f32 %v736, 0.0
    %v738 = vadd.f32 %v735, %v737
    %739 = vst [vmem:[#allocation2] sm:$0xff] %v738
    // Predicated region
    $region30: #{tpu_custom_call.1} parent=1 // pred_check
      _
    $region31: #{tpu_custom_call.1} parent=1 // pred_check_branch
      %741 = sbr.rel (0) target = $region33
    $region32: #{tpu_custom_call.1} parent=1 // pred_region
      %743 = vsyncadd [#allocation3], 0
      %s745 = sshll.u32 [#allocation2], 4
      %s746 = int_to_ptr.vmem [resolvable:$true] %s745
      %s747 = sshll.u32 %s7, 4
      %s748 = int_to_ptr.hbm [resolvable:$true] %s747
      %750 = dma.vmem_to_hbm [thread:$0]  %s746, 128, %s748, [#allocation3]
    $region33: #{tpu_custom_call.1} parent=1 // pred_fallthru
      _
    // Predicated region
    $region34: #{tpu_custom_call.1} parent=1 // pred_check
      _
    $region35: #{tpu_custom_call.1} parent=1 // pred_check_branch
      %752 = sbr.rel (0) target = $region37
    $region36: #{tpu_custom_call.1} parent=1 // pred_region
      %754 = dma.done [#allocation3], 128
    $region37: #{tpu_custom_call.1} parent=1 // pred_fallthru
      _
    %755 = vsyncpa [#allocation3], 1

</llo_original>
